<compile_context>
chip_gen: v6e
topology: v6e:2x2x1
jax: 0.10.0
libtpu: 0.0.40
codegen_flags: <defaults>
</compile_context>

<pallas_src>
import math
from functools import partial

import jax
import jax.numpy as jnp
from jax import lax
from jax.experimental import pallas as pl
from jax.experimental.pallas import tpu as pltpu

# ----------------------------- sensor config (module defaults) --------------
BIT = 10
BLACK_LEVEL = 64.0
READ_NOISE_STD = 0.5
SHOT_NOISE_STD_ALPHA = 0.4
SHOT_NOISE_STD_BETA = 0.0          # == 0 -> shot variance is linear in signal
ISO_BASE = 100.0
MAX_NBIT = float(2 ** BIT - 1 - int(BLACK_LEVEL))          # 959.0
INV_RANGE = 1.0 / MAX_NBIT

# ----------------------------- tiling config ---------------------------------
LANE_CANDIDATES = (512, 256)   # lane-dense widths whose half is 128-aligned
PAD_LANE = 512                 # fallback when no candidate divides C*H*W
MAX_TILE_ROWS = 1024           # 1024 x 512 x 4B = 2 MiB per block
MIN_TILE_ROWS = 8


def _hash_u32(x):
    """lowbias32 integer mixer -- cheap VPU-only counter-based RNG."""
    x = x ^ jnp.right_shift(x, jnp.uint32(16))
    x = x * jnp.uint32(0x7FEB352D)
    x = x ^ jnp.right_shift(x, jnp.uint32(15))
    x = x * jnp.uint32(0x846CA68B)
    x = x ^ jnp.right_shift(x, jnp.uint32(16))
    return x


def _sensor_kernel(seed_ref, gain_ref, img_ref, out_ref, *, noise_dtype):
    """One grid step = one (1, rows, lane) tile of one batch element.

    The lane axis is split in two 128-aligned halves; each 32-bit hash word
    feeds one Box-Muller pair (z1 -> left half, z2 -> right half), so RNG /
    log / trig work is shared by two output pixels and no concatenated
    full-tile temporary is materialized.
    """
    b = pl.program_id(0)
    t = pl.program_id(1)
    num_t = pl.num_programs(1)

    rows = img_ref.shape[1]            # static block rows
    lane = img_ref.shape[2]            # static; multiple of 256
    half = lane // 2                   # multiple of 128 -> lane-aligned slices

    # Per-batch scalars, hoisted (beta == 0 -> shot variance linear in signal).
    gain = gain_ref[b]
    a2g = jnp.float32(SHOT_NOISE_STD_ALPHA * SHOT_NOISE_STD_ALPHA) * gain
    r2g2 = jnp.float32(READ_NOISE_STD * READ_NOISE_STD) * gain * gain

    # ---- counter-based RNG: one uint32 word per Box-Muller pair -------------
    # int32 wrap-around is intentional (bit-identical to mod 2^32 counters).
    row_ix = lax.broadcasted_iota(jnp.int32, (rows, half), 0)
    col_ix = lax.broadcasted_iota(jnp.int32, (rows, half), 1)
    tile_id = b * num_t + t
    key = seed_ref[0] * jnp.int32(-1640531527)            # 0x9E3779B9 (wraps)
    base = tile_id * jnp.int32(rows * half) + key
    bits = _hash_u32((base + row_ix * half + col_ix).astype(jnp.uint32))

    # Two uniforms per word via the mantissa-bitcast trick (no int->float cvt):
    #   bitcast(0x3F800000 | (u16 << 7)) in [1, 2);  u1 in (0, 1], u2 in [0, 1).
    exp_one = jnp.uint32(0x3F800000)
    hi = jnp.right_shift(bits, jnp.uint32(16))
    lo = jnp.bitwise_and(bits, jnp.uint32(0xFFFF))
    u1 = jnp.float32(2.0) - pltpu.bitcast(
        exp_one | jnp.left_shift(hi, jnp.uint32(7)), jnp.float32)
    u2 = pltpu.bitcast(
        exp_one | jnp.left_shift(lo, jnp.uint32(7)), jnp.float32) - jnp.float32(1.0)

    # ---- paired Box-Muller; sin via sign * sqrt(1 - cos^2) -------------------
    # sign(sin(2*pi*u2)) is the MSB of u2's bits.  The Gaussian chain may run
    # in bf16 (noise_dtype) on v6e/v7x; the signal path below stays f32.
    # ~16-bit uniforms truncate the Gaussian at about +-4.7 sigma (documented).
    nd = noise_dtype
    t2 = -2.0 * jnp.log(u1.astype(nd))                    # = r^2, one per pair
    c = jnp.cos((2.0 * math.pi) * u2.astype(nd))
    s_mag = jnp.sqrt(jnp.maximum(1.0 - c * c, 0.0))
    sin_neg = jnp.bitwise_and(lo, jnp.uint32(0x8000)) != 0
    s = jnp.where(sin_neg, -s_mag, s_mag)
    t2 = t2.astype(jnp.float32)
    c = c.astype(jnp.float32)
    s = s.astype(jnp.float32)

    # ---- per-half signal path (f32); noise_std sqrt fused into the radius ----
    # max(.,0) also removes the NaN the reference sqrt(img-black) would emit.
    img_a = img_ref[0, :, :half]
    img_b = img_ref[0, :, half:]
    var_a = a2g * jnp.maximum(img_a - jnp.float32(BLACK_LEVEL), 0.0) + r2g2
    var_b = a2g * jnp.maximum(img_b - jnp.float32(BLACK_LEVEL), 0.0) + r2g2
    noisy_a = jnp.round(jnp.clip(img_a + jnp.sqrt(t2 * var_a) * c,
                                 0.0, jnp.float32(MAX_NBIT)))
    noisy_b = jnp.round(jnp.clip(img_b + jnp.sqrt(t2 * var_b) * s,
                                 0.0, jnp.float32(MAX_NBIT)))

    # ISP: BlackLevelCompensation -> (x - black) / (2^bit - 1 - black)
    # TODO(synk): BlackLevelCompensation source not in the snippet; implemented
    # as the standard linear BLC (no extra clamp).
    out_ref[0, :, :half] = (
        (noisy_a - jnp.float32(BLACK_LEVEL)) * jnp.float32(INV_RANGE)
    ).astype(out_ref.dtype)
    out_ref[0, :, half:] = (
        (noisy_b - jnp.float32(BLACK_LEVEL)) * jnp.float32(INV_RANGE)
    ).astype(out_ref.dtype)


def validate_iso(iso):
    """Eager host-side check (reference raises for ISO > 400).
    Keep OUTSIDE any jit-traced path."""
    iso_max = float(jnp.max(jnp.asarray(iso)))
    if iso_max > 400:
        raise ValueError(
            f"Currently noise model only works for low ISO <= 400, got {iso_max}"
        )


def _pick_tiling(B, N):
    """Choose lane width + row tiling.

    Fast path: lane divides N, so no pad / trailing slice (no extra whole-frame
    HBM round trips).  Small B==1 inputs are split into >= 2 row tiles so both
    v7x TensorCores get work; ragged last row-blocks are handled by Pallas's
    partial-block masking.
    """
    lane = None
    for cand in LANE_CANDIDATES:
        if N % cand == 0:
            lane = cand
            break
    padded = lane is None
    if padded:
        lane = PAD_LANE
    rows = -(-N // lane)

    if rows <= MAX_TILE_ROWS:
        row_tile = rows                      # full-dim block (8-multiple exempt)
    else:
        row_tile = MAX_TILE_ROWS
    num_tiles = -(-rows // row_tile)

    # v7x has 2 TensorCores: keep >= 2 grid programs for small inputs.
    if B * num_tiles < 2 and rows >= 2 * MIN_TILE_ROWS:
        row_tile = max(MIN_TILE_ROWS, ((rows + 1) // 2 + 7) // 8 * 8)
        num_tiles = -(-rows // row_tile)

    return lane, rows, row_tile, num_tiles, padded


def sensor_forward(img_nbit, iso, seed=0, out_dtype=jnp.float32,
                   noise_dtype=jnp.float32):
    """img_nbit: (B, C, H, W) float in [~black_level, 2^bit - 1]; iso: (B,).

    Returns (B, C, H, W) in [-black/(2^bit-1-black), (2^bit-1-2*black)/(2^bit-1-black)]
    (i.e. ~[-0.067, 0.933] for the defaults), dtype `out_dtype` (default f32).

    noise_dtype=jnp.bfloat16 runs the Gaussian-generation chain in bf16
    (2x VALU/EUP throughput on v6e/v7x; noise-only, signal path stays f32).
    out_dtype=jnp.bfloat16 halves HBM writeback (v5e lever) but coarsens the
    BLC quantization near 1.0.
    """
    B, C, H, W = img_nbit.shape
    N = C * H * W
    lane, rows, row_tile, num_tiles, padded = _pick_tiling(B, N)

    if not padded:
        # Free (row-major) reshape -- no pad / slice HBM round trips.
        img3 = img_nbit.reshape(B, rows, lane).astype(jnp.float32)
    else:
        flat = img_nbit.reshape(B, N).astype(jnp.float32)
        flat = jnp.pad(flat, ((0, 0), (0, rows * lane - N)),
                       constant_values=float(BLACK_LEVEL))
        img3 = flat.reshape(B, rows, lane)

    gain = (jnp.asarray(iso, jnp.float32) / jnp.float32(ISO_BASE)).reshape(B)
    seed_arr = jnp.asarray(seed, dtype=jnp.int32).reshape((1,))

    kernel = partial(_sensor_kernel, noise_dtype=noise_dtype)
    grid_spec = pltpu.PrefetchScalarGridSpec(
        num_scalar_prefetch=2,                               # seed, gain -> SMEM
        grid=(B, num_tiles),
        in_specs=[pl.BlockSpec((1, row_tile, lane), lambda b, t, *_: (b, t, 0))],
        out_specs=pl.BlockSpec((1, row_tile, lane), lambda b, t, *_: (b, t, 0)),
    )

    out3 = pl.pallas_call(
        kernel,
        out_shape=jax.ShapeDtypeStruct((B, rows, lane), out_dtype),
        grid_spec=grid_spec,
        compiler_params=pltpu.CompilerParams(
            dimension_semantics=("parallel", "parallel"),
            vmem_limit_bytes=32 * 1024 * 1024,
        ),
    )(seed_arr, gain, img3)

    if not padded:
        return out3.reshape(B, C, H, W)
    return out3.reshape(B, rows * lane)[:, :N].reshape(B, C, H, W)


if __name__ == "__main__":
    key = jax.random.PRNGKey(0)
    k_img, k_img2 = jax.random.split(key)

    # --- shape 1: B=2, C=3, H=W=16 (fast path: lane=256, one tile per batch) --
    B, C, H, W = 2, 3, 16, 16
    img_nbit = jax.random.uniform(
        k_img, (B, C, H, W), dtype=jnp.float32,
        minval=BLACK_LEVEL, maxval=float(2 ** BIT - 1),
    )
    iso = jnp.array([100.0, 400.0], dtype=jnp.float32)
    validate_iso(iso)  # eager check, outside the (jit-able) traced path

    fwd = jax.jit(sensor_forward, static_argnames=("out_dtype", "noise_dtype"))
    out = jax.block_until_ready(fwd(img_nbit, iso, 0))

    assert out.shape == (B, C, H, W)
    assert out.dtype == jnp.float32
    assert bool(jnp.all(jnp.isfinite(out)))
    # noisy clipped to [0, 959] before BLC -> output in [-64/959, 895/959]
    assert float(jnp.min(out)) >= -BLACK_LEVEL / MAX_NBIT - 1e-5
    assert float(jnp.max(out)) <= 1.0 + 1e-5
    # deterministic per seed, different across seeds
    out_rep = jax.block_until_ready(fwd(img_nbit, iso, 0))
    assert bool(jnp.all(out == out_rep))
    out_other = jax.block_until_ready(fwd(img_nbit, iso, 1))
    assert bool(jnp.any(out != out_other))

    # --- shape 2: B=1 -> grid split into 2 programs, ragged last row-block ----
    B2, C2, H2, W2 = 1, 3, 64, 64
    img2 = jax.random.uniform(
        k_img2, (B2, C2, H2, W2), dtype=jnp.float32,
        minval=BLACK_LEVEL, maxval=float(2 ** BIT - 1),
    )
    iso2 = jnp.array([200.0], dtype=jnp.float32)
    validate_iso(iso2)
    out2 = jax.block_until_ready(fwd(img2, iso2, 0))
    assert out2.shape == (B2, C2, H2, W2)
    assert bool(jnp.all(jnp.isfinite(out2)))
    assert float(jnp.min(out2)) >= -BLACK_LEVEL / MAX_NBIT - 1e-5
    assert float(jnp.max(out2)) <= 1.0 + 1e-5

    print("KERNEL_OK")
</pallas_src>

<mosaic_0001>
module attributes {stable_mosaic.version = 11 : i64} {
  func.func @_sensor_kernel(%arg0: i32, %arg1: i32, %arg2: memref<1xi32, #tpu.memory_space<smem>>, %arg3: memref<2xf32, #tpu.memory_space<smem>>, %arg4: memref<1x3x256xf32, #tpu.memory_space<vmem>>, %arg5: memref<1x3x256xf32, #tpu.memory_space<vmem>>) attributes {dimension_semantics = [#tpu.dimension_semantics<parallel>, #tpu.dimension_semantics<parallel>], iteration_bounds = array<i64: 2, 1>, scalar_prefetch = 2 : i64, scratch_operands = 0 : i64, tpu.core_type = #tpu.core_type<tc>, window_params = [{transform_indices = @transform_0, window_bounds = array<i64: 1, 3, 256>}, {transform_indices = @transform_1, window_bounds = array<i64: 1, 3, 256>}]} {
    %0 = arith.index_cast %arg0 : i32 to index
    %1 = memref.load %arg3[%0] : memref<2xf32, #tpu.memory_space<smem>>
    %cst = arith.constant 1.600000e-01 : f32
    %2 = arith.mulf %cst, %1 : f32
    %cst_0 = arith.constant 2.500000e-01 : f32
    %3 = arith.mulf %cst_0, %1 : f32
    %4 = arith.mulf %3, %1 : f32
    %5 = tpu.iota {dimensions = array<i32: 0>} : vector<3x128xi32>
    %6 = tpu.iota {dimensions = array<i32: 1>} : vector<3x128xi32>
    %c1_i32 = arith.constant 1 : i32
    %7 = arith.muli %arg0, %c1_i32 : i32
    %8 = arith.addi %7, %arg1 : i32
    %c0 = arith.constant 0 : index
    %9 = memref.load %arg2[%c0] : memref<1xi32, #tpu.memory_space<smem>>
    %c-1640531527_i32 = arith.constant -1640531527 : i32
    %10 = arith.muli %9, %c-1640531527_i32 : i32
    %c384_i32 = arith.constant 384 : i32
    %11 = arith.muli %8, %c384_i32 : i32
    %12 = arith.addi %11, %10 : i32
    %c128_i32 = arith.constant 128 : i32
    %13 = vector.broadcast %c128_i32 : i32 to vector<3x128xi32>
    %14 = arith.muli %5, %13 : vector<3x128xi32>
    %15 = vector.broadcast %12 : i32 to vector<3x128xi32>
    %16 = arith.addi %15, %14 : vector<3x128xi32>
    %17 = arith.addi %16, %6 : vector<3x128xi32>
    %c16_i32 = arith.constant 16 : i32
    %18 = vector.broadcast %c16_i32 : i32 to vector<3x128xi32>
    %19 = arith.shrui %17, %18 : vector<3x128xi32>
    %20 = arith.xori %17, %19 : vector<3x128xi32>
    %c2146121005_i32 = arith.constant 2146121005 : i32
    %21 = vector.broadcast %c2146121005_i32 : i32 to vector<3x128xi32>
    %22 = arith.muli %20, %21 : vector<3x128xi32>
    %c15_i32 = arith.constant 15 : i32
    %23 = vector.broadcast %c15_i32 : i32 to vector<3x128xi32>
    %24 = arith.shrui %22, %23 : vector<3x128xi32>
    %25 = arith.xori %22, %24 : vector<3x128xi32>
    %c-2073254261_i32 = arith.constant -2073254261 : i32
    %26 = vector.broadcast %c-2073254261_i32 : i32 to vector<3x128xi32>
    %27 = arith.muli %25, %26 : vector<3x128xi32>
    %c16_i32_1 = arith.constant 16 : i32
    %28 = vector.broadcast %c16_i32_1 : i32 to vector<3x128xi32>
    %29 = arith.shrui %27, %28 : vector<3x128xi32>
    %30 = arith.xori %27, %29 : vector<3x128xi32>
    %c16_i32_2 = arith.constant 16 : i32
    %31 = vector.broadcast %c16_i32_2 : i32 to vector<3x128xi32>
    %32 = arith.shrui %30, %31 : vector<3x128xi32>
    %c65535_i32 = arith.constant 65535 : i32
    %33 = vector.broadcast %c65535_i32 : i32 to vector<3x128xi32>
    %34 = arith.andi %30, %33 : vector<3x128xi32>
    %c7_i32 = arith.constant 7 : i32
    %35 = vector.broadcast %c7_i32 : i32 to vector<3x128xi32>
    %36 = arith.shli %32, %35 : vector<3x128xi32>
    %c1065353216_i32 = arith.constant 1065353216 : i32
    %37 = vector.broadcast %c1065353216_i32 : i32 to vector<3x128xi32>
    %38 = arith.ori %37, %36 : vector<3x128xi32>
    %39 = tpu.bitcast %38 : vector<3x128xi32> -> vector<3x128xf32>
    %cst_3 = arith.constant 2.000000e+00 : f32
    %40 = vector.broadcast %cst_3 : f32 to vector<3x128xf32>
    %41 = arith.subf %40, %39 : vector<3x128xf32>
    %c7_i32_4 = arith.constant 7 : i32
    %42 = vector.broadcast %c7_i32_4 : i32 to vector<3x128xi32>
    %43 = arith.shli %34, %42 : vector<3x128xi32>
    %c1065353216_i32_5 = arith.constant 1065353216 : i32
    %44 = vector.broadcast %c1065353216_i32_5 : i32 to vector<3x128xi32>
    %45 = arith.ori %44, %43 : vector<3x128xi32>
    %46 = tpu.bitcast %45 : vector<3x128xi32> -> vector<3x128xf32>
    %cst_6 = arith.constant 1.000000e+00 : f32
    %47 = vector.broadcast %cst_6 : f32 to vector<3x128xf32>
    %48 = arith.subf %46, %47 : vector<3x128xf32>
    %49 = math.log %41 : vector<3x128xf32>
    %cst_7 = arith.constant -2.000000e+00 : f32
    %50 = vector.broadcast %cst_7 : f32 to vector<3x128xf32>
    %51 = arith.mulf %50, %49 : vector<3x128xf32>
    %cst_8 = arith.constant 6.28318548 : f32
    %52 = vector.broadcast %cst_8 : f32 to vector<3x128xf32>
    %53 = arith.mulf %52, %48 : vector<3x128xf32>
    %54 = math.cos %53 : vector<3x128xf32>
    %55 = arith.mulf %54, %54 : vector<3x128xf32>
    %cst_9 = arith.constant 1.000000e+00 : f32
    %56 = vector.broadcast %cst_9 : f32 to vector<3x128xf32>
    %57 = arith.subf %56, %55 : vector<3x128xf32>
    %cst_10 = arith.constant 0.000000e+00 : f32
    %58 = vector.broadcast %cst_10 : f32 to vector<3x128xf32>
    %59 = arith.maximumf %57, %58 : vector<3x128xf32>
    %60 = math.sqrt %59 : vector<3x128xf32>
    %c32768_i32 = arith.constant 32768 : i32
    %61 = vector.broadcast %c32768_i32 : i32 to vector<3x128xi32>
    %62 = arith.andi %34, %61 : vector<3x128xi32>
    %c0_i32 = arith.constant 0 : i32
    %63 = vector.broadcast %c0_i32 : i32 to vector<3x128xi32>
    %64 = arith.cmpi ne, %62, %63 : vector<3x128xi32>
    %cst_11 = arith.constant 0.000000e+00 : f32
    %65 = vector.broadcast %cst_11 : f32 to vector<3x128xf32>
    %66 = arith.subf %65, %60 : vector<3x128xf32>
    %67 = arith.select %64, %66, %60 : vector<3x128xi1>, vector<3x128xf32>
    %c0_12 = arith.constant 0 : index
    %c0_13 = arith.constant 0 : index
    %c0_14 = arith.constant 0 : index
    %68 = vector.load %arg4[%c0_12, %c0_13, %c0_14] : memref<1x3x256xf32, #tpu.memory_space<vmem>>, vector<1x3x128xf32>
    %69 = vector.shape_cast %68 : vector<1x3x128xf32> to vector<3x128xf32>
    %c0_15 = arith.constant 0 : index
    %c0_16 = arith.constant 0 : index
    %c128 = arith.constant 128 : index
    %70 = vector.load %arg4[%c0_15, %c0_16, %c128] : memref<1x3x256xf32, #tpu.memory_space<vmem>>, vector<1x3x128xf32>
    %71 = vector.shape_cast %70 : vector<1x3x128xf32> to vector<3x128xf32>
    %cst_17 = arith.constant 6.400000e+01 : f32
    %72 = vector.broadcast %cst_17 : f32 to vector<3x128xf32>
    %73 = arith.subf %69, %72 : vector<3x128xf32>
    %cst_18 = arith.constant 0.000000e+00 : f32
    %74 = vector.broadcast %cst_18 : f32 to vector<3x128xf32>
    %75 = arith.maximumf %73, %74 : vector<3x128xf32>
    %76 = vector.broadcast %2 : f32 to vector<3x128xf32>
    %77 = arith.mulf %76, %75 : vector<3x128xf32>
    %78 = vector.broadcast %4 : f32 to vector<3x128xf32>
    %79 = arith.addf %77, %78 : vector<3x128xf32>
    %cst_19 = arith.constant 6.400000e+01 : f32
    %80 = vector.broadcast %cst_19 : f32 to vector<3x128xf32>
    %81 = arith.subf %71, %80 : vector<3x128xf32>
    %cst_20 = arith.constant 0.000000e+00 : f32
    %82 = vector.broadcast %cst_20 : f32 to vector<3x128xf32>
    %83 = arith.maximumf %81, %82 : vector<3x128xf32>
    %84 = vector.broadcast %2 : f32 to vector<3x128xf32>
    %85 = arith.mulf %84, %83 : vector<3x128xf32>
    %86 = vector.broadcast %4 : f32 to vector<3x128xf32>
    %87 = arith.addf %85, %86 : vector<3x128xf32>
    %88 = arith.mulf %51, %79 : vector<3x128xf32>
    %89 = math.sqrt %88 : vector<3x128xf32>
    %90 = arith.mulf %89, %54 : vector<3x128xf32>
    %91 = arith.addf %69, %90 : vector<3x128xf32>
    %cst_21 = arith.constant 0.000000e+00 : f32
    %cst_22 = arith.constant 9.590000e+02 : f32
    %92 = vector.broadcast %cst_21 : f32 to vector<3x128xf32>
    %93 = arith.maximumf %92, %91 : vector<3x128xf32>
    %94 = vector.broadcast %cst_22 : f32 to vector<3x128xf32>
    %95 = arith.minimumf %94, %93 : vector<3x128xf32>
    %96 = math.roundeven %95 : vector<3x128xf32>
    %97 = arith.mulf %51, %87 : vector<3x128xf32>
    %98 = math.sqrt %97 : vector<3x128xf32>
    %99 = arith.mulf %98, %67 : vector<3x128xf32>
    %100 = arith.addf %71, %99 : vector<3x128xf32>
    %cst_23 = arith.constant 0.000000e+00 : f32
    %cst_24 = arith.constant 9.590000e+02 : f32
    %101 = vector.broadcast %cst_23 : f32 to vector<3x128xf32>
    %102 = arith.maximumf %101, %100 : vector<3x128xf32>
    %103 = vector.broadcast %cst_24 : f32 to vector<3x128xf32>
    %104 = arith.minimumf %103, %102 : vector<3x128xf32>
    %105 = math.roundeven %104 : vector<3x128xf32>
    %cst_25 = arith.constant 6.400000e+01 : f32
    %106 = vector.broadcast %cst_25 : f32 to vector<3x128xf32>
    %107 = arith.subf %96, %106 : vector<3x128xf32>
    %cst_26 = arith.constant 0.00104275288 : f32
    %108 = vector.broadcast %cst_26 : f32 to vector<3x128xf32>
    %109 = arith.mulf %107, %108 : vector<3x128xf32>
    %c0_27 = arith.constant 0 : index
    %c0_28 = arith.constant 0 : index
    %c0_29 = arith.constant 0 : index
    %110 = vector.load %arg5[%c0_27, %c0_28, %c0_29] : memref<1x3x256xf32, #tpu.memory_space<vmem>>, vector<1x3x128xf32>
    %111 = vector.shape_cast %110 : vector<1x3x128xf32> to vector<3x128xf32>
    %112 = vector.shape_cast %109 : vector<3x128xf32> to vector<1x3x128xf32>
    tpu.vector_store %arg5[%c0_27, %c0_28, %c0_29], %112 {strides = array<i32>} : memref<1x3x256xf32, #tpu.memory_space<vmem>>, vector<1x3x128xf32>,
    %cst_30 = arith.constant 6.400000e+01 : f32
    %113 = vector.broadcast %cst_30 : f32 to vector<3x128xf32>
    %114 = arith.subf %105, %113 : vector<3x128xf32>
    %cst_31 = arith.constant 0.00104275288 : f32
    %115 = vector.broadcast %cst_31 : f32 to vector<3x128xf32>
    %116 = arith.mulf %114, %115 : vector<3x128xf32>
    %c0_32 = arith.constant 0 : index
    %c0_33 = arith.constant 0 : index
    %c128_34 = arith.constant 128 : index
    %117 = vector.load %arg5[%c0_32, %c0_33, %c128_34] : memref<1x3x256xf32, #tpu.memory_space<vmem>>, vector<1x3x128xf32>
    %118 = vector.shape_cast %117 : vector<1x3x128xf32> to vector<3x128xf32>
    %119 = vector.shape_cast %116 : vector<3x128xf32> to vector<1x3x128xf32>
    tpu.vector_store %arg5[%c0_32, %c0_33, %c128_34], %119 {strides = array<i32>} : memref<1x3x256xf32, #tpu.memory_space<vmem>>, vector<1x3x128xf32>,
    return
  }
  func.func @transform_0(%arg0: i32, %arg1: i32, %arg2: memref<1xi32, #tpu.memory_space<smem>>, %arg3: memref<2xf32, #tpu.memory_space<smem>>) -> (i32, i32, i32) {
    %c0_i32 = arith.constant 0 : i32
    %c0_i32_0 = arith.constant 0 : i32
    return %arg0, %arg1, %c0_i32 : i32, i32, i32
  }
  func.func @transform_1(%arg0: i32, %arg1: i32, %arg2: memref<1xi32, #tpu.memory_space<smem>>, %arg3: memref<2xf32, #tpu.memory_space<smem>>) -> (i32, i32, i32) {
    %c0_i32 = arith.constant 0 : i32
    %c0_i32_0 = arith.constant 0 : i32
    return %arg0, %arg1, %c0_i32 : i32, i32, i32
  }
}

</mosaic_0001>

<llo_original>
// kernel: sensor_forward.1
$region0: #{sensor_forward.1}
  #allocation0 [shape = 'u32[]', space=smem, size = 0x4, offset = 0x4, fixed_abs, tag = 'smem constant byte address 0x4 - core index']
  #allocation1 [shape = 'u32[144,128]{1,0:T(1,128)}', space=vmem, size = 0x12000, scoped, tag = 'internal scratch']
  #allocation2 [shape = 's32[1]{0}', space=sflag, size = 0x4, scoped, tag = 'scoped memory for sensor_forward.1']
  #allocation3 [shape = 's32[1]{0:T(128)S(6)}', space=smem, size = 0x200, scoped, tag = 'prefetched SMEM operand 0']
  #allocation4 [shape = 'u8[512]{0}', space=smem, size = 0x200, scoped, tag = 'prefetched SMEM operand 1']
  %s0 = inlined_call_operand.<no memory space> [shape: s32[1], index: 0, kind: input, shape index: {}]
  %s1 = inlined_call_operand.vmem [shape: f32[2], index: 1, kind: input, shape index: {}]
  %s2 = inlined_call_operand.vmem [shape: f32[2,3,256], index: 2, kind: input, shape index: {}]
  %s3 = inlined_call_operand.vmem [shape: f32[2,3,256], index: 3, kind: output, shape index: {}]
  %s4 = sld [smem:[#allocation0]]
  $region37: #{sensor_forward.1} parent=0
    _
  %s6 = ssub.s32 1, %s4
  %s7 = scalar_select 0, %s6, %s4
  %8 = sst [smem:[#allocation3]] %s0
  %s9 = sshll.u32 %s1, 4
  %s10 = int_to_ptr.vmem [resolvable:$true] %s9
  %12 = dma.vmem_to_smem %s10, 16, [#allocation4], [#allocation2]
  %13 = dma.done [#allocation2], 16
  %14 = sfence
  loop: start=0, step=1, limit=4
  $region2: #{sensor_forward.1} parent=0 // loop_pre_header
    _
  $region3: #{sensor_forward.1} parent=0 // loop_header
    %s16 = sphi 0, %s20
    %p17 = scmp.ge.s32.totalorder %s16, 4
    %s23 = sphi 0, %s35
    %s24 = sphi 0, %s31
    %s25 = sphi 0, %s23
    %s26 = sphi 0, %s24
    %s27 = sphi 0, %s25
    %s28 = sphi 0, %s26
    %s40 = sphi 0, %s42
    %s43 = sphi 0, %s40
    %s44 = sphi 0, %s43
    %s60 = sphi 0, %s44
    %s68 = sphi 0, %s70
    %s71 = sphi 0, %s68
    %s72 = sphi 0, %s71
    %s88 = sphi 0, %s72
  $region4: #{sensor_forward.1} parent=0 // loop_header_branch
    %19 = sbr.rel (%p17) target = $region8
  $region5: #{sensor_forward.1} parent=0 // loop_body
    %s21 = ssub.s32 %s16, 1
    %s22 = ssub.s32 %s16, 2
    %s29 = sadd.s32 1, %s24
    %p30 = scmp.ge.s32.totalorder %s29, 1
    %s31 = scalar_select %p30, 0, %s29
    %s32 = sadd.s32 1, %s23
    %s33 = scalar_select %p30, %s32, %s23
    %p34 = scmp.ge.s32.totalorder %s33, 2
    %s35 = scalar_select %p34, 0, %s33
    %s36 = ssub.s32 %s23, %s35
    %s37 = ssub.s32 %s24, %s31
    %s38 = sor.u32 %s36, %s37
    %p39 = scmp.eq.s32.totalorder %s38, 0
    %s41 = sadd.s32 %s40, 1
    %s42 = scalar_select %p39, %s40, %s41
    %p45 = pneg %p39
    %p46 = scmp.eq.s32.totalorder %s16, 1
    %p47 = por %p45, %p46
    %p48 = scmp.ne.s32.totalorder %s40, %s43
    %p49 = scmp.eq.s32.totalorder %s16, 0
    %p50 = por %p48, %p49
    %p51 = scmp.ne.s32.totalorder %s40, %s43
    %p52 = scmp.eq.s32.totalorder %s21, 1
    %p53 = por %p51, %p52
    %p54 = scmp.ne.s32.totalorder %s43, %s44
    %p55 = scmp.eq.s32.totalorder %s21, 0
    %p56 = por %p54, %p55
    %p57 = scmp.ne.s32.totalorder %s43, %s44
    %p58 = scmp.eq.s32.totalorder %s22, 1
    %p59 = por %p57, %p58
    %p61 = scmp.ne.s32.totalorder %s44, %s60
    %p62 = scmp.eq.s32.totalorder %s22, 0
    %p63 = por %p61, %p62
    %s64 = ssub.s32 %s23, %s35
    %s65 = ssub.s32 %s24, %s31
    %s66 = sor.u32 %s64, %s65
    %p67 = scmp.eq.s32.totalorder %s66, 0
    %s69 = sadd.s32 %s68, 1
    %s70 = scalar_select %p67, %s68, %s69
    %p73 = pneg %p67
    %p74 = scmp.eq.s32.totalorder %s16, 1
    %p75 = por %p73, %p74
    %p76 = scmp.ne.s32.totalorder %s68, %s71
    %p77 = scmp.eq.s32.totalorder %s16, 0
    %p78 = por %p76, %p77
    %p79 = scmp.ne.s32.totalorder %s68, %s71
    %p80 = scmp.eq.s32.totalorder %s21, 1
    %p81 = por %p79, %p80
    %p82 = scmp.ne.s32.totalorder %s71, %s72
    %p83 = scmp.eq.s32.totalorder %s21, 0
    %p84 = por %p82, %p83
    %p85 = scmp.ne.s32.totalorder %s71, %s72
    %p86 = scmp.eq.s32.totalorder %s22, 1
    %p87 = por %p85, %p86
    %p89 = scmp.ne.s32.totalorder %s72, %s88
    %p90 = scmp.eq.s32.totalorder %s22, 0
    %p91 = por %p89, %p90
    %p92 = scmp.le.s32.totalorder 1, %s16
    %p93 = scmp.lt.s32.totalorder %s16, 3
    %p94 = pnand %p92, %p93
    %p95 = pneg %p94
    // Predicated region
    $region9: #{sensor_forward.1} parent=5 // pred_check
      _
    $region10: #{sensor_forward.1} parent=5 // pred_check_branch
      %97 = sbr.rel (%p94) target = $region12
    $region11: #{sensor_forward.1} parent=5 // pred_region
      %s98 = ssub.s32 %s16, 1
    $region12: #{sensor_forward.1} parent=5 // pred_fallthru
      _
    %p99 = scmp.lt.s32.totalorder %s16, 2
    // Predicated region
    $region13: #{sensor_forward.1} parent=5 // pred_check
      %p100 = pneg %p99
    $region14: #{sensor_forward.1} parent=5 // pred_check_branch
      %102 = sbr.rel (%p100) target = $region16
    $region15: #{sensor_forward.1} parent=5 // pred_region
      // Predicated region
      $region17: #{sensor_forward.1} parent=15 // pred_check
        %p103 = pneg %p50
      $region18: #{sensor_forward.1} parent=15 // pred_check_branch
        %105 = sbr.rel (%p103) target = $region20
      $region19: #{sensor_forward.1} parent=15 // pred_region
        %p106 = scmp.lt.s32.totalorder %s23, 1
        %s107 = scalar_select %p106, %s23, 1
        %p108 = scmp.lt.s32.totalorder %s24, 0
        %s109 = scalar_select %p108, %s24, 0
        %s110 = smul.addr %s109, 2
        %s111 = smul.addr %s107, 2
        %s112 = sadd.s32 %s110, %s111
        %s113 = smul.addr %s112, 4
        %s114 = scalar_lea.vmem %s2, %s113
      $region20: #{sensor_forward.1} parent=15 // pred_fallthru
        _
    $region16: #{sensor_forward.1} parent=5 // pred_fallthru
      _
    %p115 = scmp.le.s32.totalorder 1, %s16
    %p116 = scmp.lt.s32.totalorder %s16, 3
    %p117 = pnand %p115, %p116
    %p118 = pneg %p117
    // Predicated region
    $region21: #{sensor_forward.1} parent=5 // pred_check
      _
    $region22: #{sensor_forward.1} parent=5 // pred_check_branch
      %120 = sbr.rel (%p117) target = $region24
    $region23: #{sensor_forward.1} parent=5 // pred_region
      %s121 = ssub.s32 %s16, 1
      %p122 = scmp.lt.s32.totalorder %s25, 1
      %s123 = scalar_select %p122, %s25, 1
      %p124 = scmp.lt.s32.totalorder %s26, 0
      %s125 = scalar_select %p124, %s26, 0
      %s126 = smul.addr %s125, 2
      %s127 = smul.addr %s123, 2
      %s128 = sadd.s32 %s126, %s127
      %s129 = smul.addr %s128, 4
      %s130 = scalar_lea.vmem %s2, %s129
      %p131 = pneg %p56
      %p132 = pneg %p53
      %p133 = pneg %p84
      %p134 = pneg %p81
      %p135 = scmp.lt.s32.totalorder %s25, 1
      %s136 = scalar_select %p135, %s25, 1
      %p137 = scmp.lt.s32.totalorder %s26, 0
      %s138 = scalar_select %p137, %s26, 0
      %s139 = smul.addr %s138, 2
      %s140 = smul.addr %s136, 2
      %s141 = sadd.s32 %s139, %s140
      %s142 = smul.addr %s141, 4
      %s143 = scalar_lea.vmem %s3, %s142
      %p144 = scmp.lt.s32.totalorder %s25, 1
      %s145 = scalar_select %p144, %s25, 1
      %p146 = scmp.lt.s32.totalorder %s26, 0
      %s147 = scalar_select %p146, %s26, 0
      %s148 = smul.addr %s147, 2
      %s149 = smul.addr %s145, 2
      %s150 = sadd.s32 %s148, %s149
      %s151 = smul.addr %s150, 4
      %s152 = scalar_lea.vmem %s2, %s151
      %p153 = scmp.lt.s32.totalorder %s25, 1
      %s154 = scalar_select %p153, %s25, 1
      %p155 = scmp.lt.s32.totalorder %s26, 0
      %s156 = scalar_select %p155, %s26, 0
      %s157 = smul.addr %s156, 2
      %s158 = smul.addr %s154, 2
      %s159 = sadd.s32 %s157, %s158
      %s160 = smul.addr %s159, 4
      %s161 = scalar_lea.vmem %s3, %s160
      %s162 = sld [smem:[#allocation4 + %s25]]
      %s163 = smul.f32 %s162, 0.16
      %s164 = smul.f32 %s162, 0.25
      %s165 = smul.f32 %s164, %s162
      %v166 = vlaneseq
      %v167 = vshrl.u32 %v166, 7
      %v168 = vlaneseq
      %v169 = vand.u32 %v168, 127
      %s170 = sadd.s32 %s25, %s26
      %s171 = sld [smem:[#allocation3]]
      %s172 = smul.u32 %s171, 2654435769
      %s173 = smul.u32 %s170, 384
      %s174 = sadd.s32 %s173, %s172
      %v175 = vmul.u32 %v167, 128
      %v176 = vstv %s174
      %v177 = vadd.s32 %v176, %v175
      %v178 = vadd.s32 %v177, %v169
      %v179 = vshrl.u32 %v178, 16
      %v180 = vxor.u32 %v178, %v179
      %v181 = vmul.u32 %v180, 2146121005
      %v182 = vshrl.u32 %v181, 15
      %v183 = vxor.u32 %v181, %v182
      %v184 = vmul.u32 %v183, 2221713035
      %v185 = vshrl.u32 %v184, 16
      %v186 = vxor.u32 %v184, %v185
      %v187 = vshrl.u32 %v186, 16
      %v188 = vand.u32 %v186, 65535
      %v189 = vshll.u32 %v187, 7
      %v190 = vor.u32 %v189, 1065353216
      %v192 = vsub.f32 2.0, %v190
      %v193 = vshll.u32 %v188, 7
      %v194 = vor.u32 %v193, 1065353216
      %v196 = vsub.f32 %v194, 1.0
      %v197 = vlog2.pop %v192
      %v198 = vmul.f32 %v197, 0.6931472
      %v199 = vmul.f32 %v198, -2.0
      %v200 = vmul.f32 %v196, 6.2831855
      %v201 = vand.u32 2147483647, %v200
      %vm202 = vcmp.le.f32.partialorder %v201, 0.7853982
      %vm203 = vcmp.lt.s32.totalorder %v200, 0
      %v204 = vand.u32 %v200, 2139095040
      %v205 = vshrl.u32 %v204, 23
      %v206 = vsub.s32 %v205, 127
      %v207 = vand.u32 2147483647, %v200
      %v208 = vand.u32 %v207, 8388607
      %v209 = vor.u32 %v208, 8388608
      %v210 = vsub.s32 0, %v209
      %v211 = vadd.s32 %v206, 1
      %vm212 = vcmp.gt.s32.totalorder %v211, 0
      %v213 = vsel %vm212, %v211, 0
      %v214 = vshrl.u32 %v213, 5
      %v215 = vand.u32 %v213, 31
      %v216 = vsub.s32 32, %v215
      %v217 = vshrl.u32 683565275, %v216
      %v218 = vshll.u32 683565275, %v215
      %v219 = vshrl.u32 2475754826, %v216
      %v220 = vor.u32 %v218, %v219
      %v221 = vshll.u32 2475754826, %v215
      %v222 = vshrl.u32 2131351028, %v216
      %v223 = vor.u32 %v221, %v222
      %v224 = vshll.u32 2131351028, %v215
      %v225 = vshrl.u32 2102212464, %v216
      %v226 = vor.u32 %v224, %v225
      %v227 = vshll.u32 2102212464, %v215
      %v228 = vshrl.u32 920167782, %v216
      %v229 = vor.u32 %v227, %v228
      %v230 = vshll.u32 920167782, %v215
      %v231 = vshrl.u32 1326507024, %v216
      %v232 = vor.u32 %v230, %v231
      %vm233 = vcmp.lt.s32.totalorder %v214, 1
      %vm234 = vcmp.lt.s32.totalorder %v214, 2
      %vm235 = vcmp.lt.s32.totalorder %v214, 3
      %vm236 = vcmp.lt.s32.totalorder %v214, 4
      %v237 = vsel %vm233, %v217, %v220
      %v238 = vsel %vm236, %v226, 2102212464
      %v239 = vsel %vm235, %v223, %v238
      %v240 = vsel %vm234, %v237, %v239
      %v241 = vsel %vm233, %v220, %v223
      %v242 = vsel %vm236, %v229, 920167782
      %v243 = vsel %vm235, %v226, %v242
      %v244 = vsel %vm234, %v241, %v243
      %v245 = vsel %vm233, %v223, %v226
      %v246 = vsel %vm236, %v232, 1326507024
      %v247 = vsel %vm235, %v229, %v246
      %v248 = vsel %vm234, %v245, %v247
      %v249 = vshll.u32 %v209, 8
      %v250 = vmul.u32.u64.compose %v249, %v248
      %v251 = vextract.low.u32 %v250
      %v252 = vextract.high.u32 %v250
      %v253 = vmul.u32.u64.compose %v249, %v244
      %v254 = vextract.low.u32 %v253
      %v255 = vextract.high.u32 %v253
      %v256 = vmul.u32 %v249, %v240
      %v257 = vadd.s32 %v252, %v254
      %vm258 = vc.u32 %v252, %v254
      %v259 = vadd.s32 %v255, 1
      %v260 = vsel %vm258, %v259, %v255
      %v261 = vadd.s32 %v256, %v260
      %v262 = vadd.s32 %v261, 536870912
      %v263 = vshrl.u32 %v262, 30
      %v264 = vshll.u32 %v263, 30
      %v265 = vsub.s32 %v261, %v264
      %vm266 = vcmp.lt.s32.totalorder %v265, 0
      %v267 = vsub.s32 0, %v265
      %v268 = vsel %vm266, %v267, %v265
      %v269 = vclz %v268
      %v270 = vsub.s32 %v269, 2
      %vm271 = vcmp.gt.s32.totalorder 0, %v270
      %v272 = vsel %vm271, 0, %v270
      %v273 = vsub.s32 32, %v272
      %v274 = vshll.u32 %v265, %v272
      %v275 = vshrl.u32 %v257, %v273
      %v276 = vor.u32 %v274, %v275
      %v277 = vsub.s32 4294967266, %v272
      %v278 = vadd.s32 %v277, 127
      %v279 = vshll.u32 %v278, 23
      %v280 = vor.u32 4788187, %v279
      %v281 = vand.u32 2147483647, %v280
      %v283 = vcvt.s32.f32 %v276
      %v284 = vmul.f32 %v283, %v281
      %v285 = vxor.u32 %v284, 2147483648
      %v286 = vsel %vm203, %v285, %v284
      %v287 = vsub.s32 4, %v263
      %v288 = vsel %vm203, %v287, %v263
      %v289 = vsel %vm202, %v200, %v286
      %v290 = vsel %vm202, 0, %v288
      %v291 = vcosq.f32.pop %v289
      %v292 = vsinq.f32.pop %v289
      %vm293 = vweird.f32 %v200
      %v294 = vand.u32 %v290, 3
      %vm295 = vcmp.lt.s32.totalorder %v294, 2
      %vm296 = vcmp.eq.s32.totalorder %v294, 0
      %v297 = vxor.u32 %v292, 2147483648
      %v298 = vsel %vm296, %v291, %v297
      %vm299 = vcmp.eq.s32.totalorder %v294, 2
      %v300 = vxor.u32 %v291, 2147483648
      %v301 = vsel %vm299, %v300, %v292
      %v302 = vsel %vm295, %v298, %v301
      %v303 = vsel %vm293, nan, %v302
      %v304 = vmul.f32 %v303, %v303
      %v305 = vsub.f32 1.0, %v304
      %v306 = vmax.f32 %v305, 0.0
      %v307 = vrsqrt.pop %v306
      %v308 = vmul.f32 %v306, %v307
      %vm309 = vcmp.eq.f32.partialorder %v306, inf
      %v310 = vsel %vm309, %v306, %v308
      %vm311 = vcmp.eq.f32.partialorder %v306, 0.0
      %v312 = vand.u32 %v306, 2147483648
      %v313 = vsel %vm311, %v312, %v310
      %v314 = vand.u32 %v188, 32768
      %vm315 = vcmp.ne.s32.totalorder %v314, 0
      %v316 = vsub.f32 0.0, %v313
      %v317 = vsel %vm315, %v316, %v313
      %v318 = vld [vmem:[%s152] sm:$0x7]
      %v319 = vld [vmem:[%s152 + $0x4] sm:$0x7]
      %v320 = vsub.f32 %v318, 64.0
      %v321 = vmax.f32 %v320, 0.0
      %v322 = vstv %s163
      %v323 = vmul.f32 %v322, %v321
      %v324 = vstv %s165
      %v325 = vadd.f32 %v323, %v324
      %v326 = vsub.f32 %v319, 64.0
      %v327 = vmax.f32 %v326, 0.0
      %v328 = vmul.f32 %v322, %v327
      %v329 = vadd.f32 %v328, %v324
      %v330 = vmul.f32 %v199, %v325
      %v331 = vrsqrt.pop %v330
      %v332 = vmul.f32 %v330, %v331
      %vm333 = vcmp.eq.f32.partialorder %v330, inf
      %v334 = vsel %vm333, %v330, %v332
      %vm335 = vcmp.eq.f32.partialorder %v330, 0.0
      %v336 = vand.u32 %v330, 2147483648
      %v337 = vsel %vm335, %v336, %v334
      %v338 = vmul.f32 %v337, %v303
      %v339 = vadd.f32 %v318, %v338
      %v340 = vmax.f32 %v339, 0.0
      %v341 = vmin.f32 %v340, 959.0
      %v342 = vround.ne.pseudo %v341
      %v343 = vmul.f32 %v199, %v329
      %v344 = vrsqrt.pop %v343
      %v345 = vmul.f32 %v343, %v344
      %vm346 = vcmp.eq.f32.partialorder %v343, inf
      %v347 = vsel %vm346, %v343, %v345
      %vm348 = vcmp.eq.f32.partialorder %v343, 0.0
      %v349 = vand.u32 %v343, 2147483648
      %v350 = vsel %vm348, %v349, %v347
      %v351 = vmul.f32 %v350, %v317
      %v352 = vadd.f32 %v319, %v351
      %v353 = vmax.f32 %v352, 0.0
      %v354 = vmin.f32 %v353, 959.0
      %v355 = vround.ne.pseudo %v354
      %v356 = vsub.f32 %v342, 64.0
      %v357 = vmul.f32 %v356, 0.0010427529
      %358 = vst [vmem:[%s161] sm:$0x7] %v357
      %v359 = vsub.f32 %v355, 64.0
      %v360 = vmul.f32 %v359, 0.0010427529
      %361 = vst [vmem:[%s161 + $0x4] sm:$0x7] %v360
      %p362 = scmp.lt.s32.totalorder %s25, 1
      %s363 = scalar_select %p362, %s25, 1
      %p364 = scmp.lt.s32.totalorder %s26, 0
      %s365 = scalar_select %p364, %s26, 0
      %s366 = smul.addr %s365, 2
      %s367 = smul.addr %s363, 2
      %s368 = sadd.s32 %s366, %s367
      %s369 = smul.addr %s368, 4
      %s370 = scalar_lea.vmem %s3, %s369
      // Predicated region
      $region25: #{sensor_forward.1} parent=23 // pred_check
        %p371 = pneg %p81
      $region26: #{sensor_forward.1} parent=23 // pred_check_branch
        %373 = sbr.rel (%p371) target = $region28
      $region27: #{sensor_forward.1} parent=23 // pred_region
        _
      $region28: #{sensor_forward.1} parent=23 // pred_fallthru
        _
    $region24: #{sensor_forward.1} parent=5 // pred_fallthru
      _
    %p374 = scmp.le.s32.totalorder 2, %s16
    // Predicated region
    $region29: #{sensor_forward.1} parent=5 // pred_check
      %p375 = pneg %p374
    $region30: #{sensor_forward.1} parent=5 // pred_check_branch
      %377 = sbr.rel (%p375) target = $region32
    $region31: #{sensor_forward.1} parent=5 // pred_region
      %s378 = ssub.s32 %s16, 2
      // Predicated region
      $region33: #{sensor_forward.1} parent=31 // pred_check
        %p379 = pneg %p87
      $region34: #{sensor_forward.1} parent=31 // pred_check_branch
        %381 = sbr.rel (%p379) target = $region36
      $region35: #{sensor_forward.1} parent=31 // pred_region
        %p382 = scmp.lt.s32.totalorder %s27, 1
        %s383 = scalar_select %p382, %s27, 1
        %p384 = scmp.lt.s32.totalorder %s28, 0
        %s385 = scalar_select %p384, %s28, 0
        %s386 = smul.addr %s385, 2
        %s387 = smul.addr %s383, 2
        %s388 = sadd.s32 %s386, %s387
        %s389 = smul.addr %s388, 4
        %s390 = scalar_lea.vmem %s3, %s389
      $region36: #{sensor_forward.1} parent=31 // pred_fallthru
        _
    $region32: #{sensor_forward.1} parent=5 // pred_fallthru
      _
  $region6: #{sensor_forward.1} parent=0 // loop_footer
    %s20 = sadd.s32 1, %s16
  $region7: #{sensor_forward.1} parent=0 // loop_footer_branch
    %15 = sbr.rel target = $region3
  $region8: #{sensor_forward.1} parent=0 // loop_exit
    _

</llo_original>
